<compile_context>
chip_gen: v7x
topology: tpu7x:2x2x1
jax: 0.10.0
libtpu: 0.0.40
codegen_flags: <defaults>
</compile_context>

<pallas_src>
import functools

import jax
import jax.numpy as jnp
from jax.experimental import pallas as pl
from jax.experimental.pallas import tpu as pltpu


# ----------------------------------------------------------------------------
# batch-tile selection (lane dimension of every block)
# ----------------------------------------------------------------------------
def _round_up(x, m):
    return ((x + m - 1) // m) * m


def _choose_tb(batch, d_in, h1, f, h2):
    """Small batches: one full tile (block last dim == full array dim).
    Large batches: multiple of 128 sized from the per-chip VMEM budget,
    keeping >= ~4 grid steps for pipeline overlap / v7x dual-core sharding."""
    if batch <= 512:
        return batch
    # f32 bytes per batch column: double-buffered in/out blocks + z/h1/h2
    # intermediates (sublane-padded) + slack.
    per_col = 4 * (2 * _round_up(d_in, 8) + 2 * 8
                   + _round_up(h1 + f + 1, 8) + _round_up(h1, 8)
                   + _round_up(h2, 8) + 32)
    try:
        vmem = pltpu.get_tpu_info().vmem_capacity_bytes
    except Exception:
        vmem = 64 << 20
    budget = min(vmem // 8, 8 << 20)          # well inside default scoped VMEM
    tb = max(128, (budget // per_col) // 128 * 128)
    tb = min(tb, max(128, _round_up(pl.cdiv(batch, 4), 128)))   # >= ~4 steps
    return min(tb, _round_up(batch, 128))


# ----------------------------------------------------------------------------
# fused kernel: FM (factored) + first-order biases + MLP (BN folded, eval)
#   batch is the LANE axis; all feature dims live on sublanes.
# ----------------------------------------------------------------------------
def deepfm_kernel(x_ref, wbig_ref, c_ref, b1_ref, w2_ref, b2_ref, w3_ref,
                  b3_ref, out_ref, *, f_dim, h1_dim):
    x = x_ref[...]                                                # (D_in, TB)

    # single MXU pass over the compact input: rows = [h1_pre | sum_f | linear]
    z = jnp.dot(wbig_ref[...], x,
                preferred_element_type=jnp.float32)               # (H1+F+1, TB)

    h1_pre = z[:h1_dim, :] + b1_ref[...]                          # (H1, TB)
    sum_f = z[h1_dim:h1_dim + f_dim, :]                           # (F,  TB)
    lin = z[h1_dim + f_dim:h1_dim + f_dim + 1, :]                 # (1,  TB)

    # FM 2nd order: 0.5 * (||sum_f||^2 - sum_field ||emb_field||^2)
    pow_sum = jnp.sum(x * x * c_ref[...], axis=0, keepdims=True)  # (1, TB)
    fm = 0.5 * (jnp.sum(sum_f * sum_f, axis=0, keepdims=True) - pow_sum)

    # deep MLP: (Linear + folded BN) -> ReLU, x2, final Linear(H2 -> 1)
    h1 = jnp.maximum(h1_pre, 0.0)
    h2 = jnp.dot(w2_ref[...], h1, preferred_element_type=jnp.float32) + b2_ref[...]
    h2 = jnp.maximum(h2, 0.0)
    dnn = jnp.sum(h2 * w3_ref[...], axis=0, keepdims=True) + b3_ref[...]

    out_ref[...] = fm + lin + dnn                                 # (1, TB)


# ----------------------------------------------------------------------------
# wrapper
# ----------------------------------------------------------------------------
def deepfm_forward(p, user_ids, item_ids, user_feats, item_feats, train=True):
    batch = user_ids.shape[0]
    f_dim = p["W_user"].shape[1]
    uf = user_feats.shape[1]
    itf = item_feats.shape[1]
    fb_dim = uf + itf
    d_in = 2 * f_dim + fb_dim + 1
    h1_dim = p["W1"].shape[1]
    h2_dim = p["W2"].shape[1]

    # ---- gathers + low-rank item update (O(batch), plain JAX / XLA fused) --
    user_embs = p["W_user"][user_ids]                                  # (B, F)
    item_embs = p["W_item"][item_ids]                                  # (B, F)
    if train:
        item_embs = p["A"][item_ids] @ p["B"] + item_embs
    feats = jnp.concatenate([user_feats, item_feats], axis=1)          # (B, Fb)
    bias0 = (p["user_bias"][user_ids] + p["item_bias"][item_ids]
             + p["offset"][0])[:, None]                                # (B, 1)

    # compact batch-on-lane input (D_in, B) — no (B, E) allflat tensor.
    xin_t = jnp.concatenate(
        [user_embs.T, item_embs.T, feats.T, bias0.T], axis=0
    ).astype(jnp.float32)                                              # (D_in, B)

    # ---- fold eval-mode BatchNorm into the Linear layers (param-only) ------
    eps = 1e-5
    s1 = p["bn1_gamma"] / jnp.sqrt(p["bn1_var"] + eps)
    w1p = p["W1"] * s1[None, :]
    b1p = p["b1"] * s1 + (p["bn1_beta"] - p["bn1_mean"] * s1)
    s2 = p["bn2_gamma"] / jnp.sqrt(p["bn2_var"] + eps)
    w2p = p["W2"] * s2[None, :]
    b2p = p["b2"] * s2 + (p["bn2_beta"] - p["bn2_mean"] * s2)

    # ---- factor the (B, E) embedding out of W1 / FM (param-only, cacheable) -
    w_feat = jnp.concatenate([p["W_ufeat"], p["W_ifeat"]], axis=0)     # (Fb, F)
    fb_cat = jnp.concatenate([p["user_feat_bias"], p["item_feat_bias"]])
    w1r = w1p.reshape(2 + fb_dim, f_dim, h1_dim)                       # (Nf,F,H1)
    wh = jnp.concatenate([
        w1r[0],                                             # user-emb field
        w1r[1],                                             # item-emb field
        jnp.einsum("uj,ujh->uh", w_feat, w1r[2:]),          # M_u / M_i fold
        jnp.zeros((1, h1_dim), jnp.float32),                # bias0 column
    ], axis=0)                                                         # (D_in, H1)
    eye = jnp.eye(f_dim, dtype=jnp.float32)
    wf = jnp.concatenate([eye, eye, w_feat,
                          jnp.zeros((1, f_dim), jnp.float32)], axis=0)  # (D_in, F)
    lin = jnp.concatenate([jnp.zeros((2 * f_dim,), jnp.float32), fb_cat,
                           jnp.ones((1,), jnp.float32)])                # (D_in,)
    w_big_t = jnp.concatenate([wh, wf, lin[:, None]], axis=1).T         # (H1+F+1, D_in)
    c_col = jnp.concatenate([jnp.ones((2 * f_dim,), jnp.float32),
                             jnp.sum(w_feat * w_feat, axis=1),
                             jnp.zeros((1,), jnp.float32)])[:, None]    # (D_in, 1)
    b1_col = b1p[:, None]                                               # (H1, 1)
    w2t = w2p.T                                                         # (H2, H1)
    b2_col = b2p[:, None]                                               # (H2, 1)
    w3_col = p["W3"].reshape(h2_dim, 1)                                 # (H2, 1)
    b3 = p["b3"].reshape(1, 1)                                          # (1, 1)

    tb = _choose_tb(batch, d_in, h1_dim, f_dim, h2_dim)

    def tiled(rows):          # batch-tiled (lane axis) blocks
        return pl.BlockSpec((rows, tb), lambda i: (0, i))

    def resident(shape):      # weights / constants: same block every step
        return pl.BlockSpec(shape, lambda i: (0, 0))

    out = pl.pallas_call(
        functools.partial(deepfm_kernel, f_dim=f_dim, h1_dim=h1_dim),
        grid=(pl.cdiv(batch, tb),),
        in_specs=[
            tiled(d_in),                              # xin_t
            resident((h1_dim + f_dim + 1, d_in)),     # fused [Wh|Wf|lin]^T
            resident((d_in, 1)),                      # sum-of-squares coeffs
            resident((h1_dim, 1)),                    # b1 (BN folded)
            resident((h2_dim, h1_dim)),               # W2^T (BN folded)
            resident((h2_dim, 1)),                    # b2 (BN folded)
            resident((h2_dim, 1)),                    # W3 column
            resident((1, 1)),                         # b3
        ],
        out_specs=pl.BlockSpec((1, tb), lambda i: (0, i)),
        out_shape=jax.ShapeDtypeStruct((1, batch), jnp.float32),
        compiler_params=pltpu.CompilerParams(
            dimension_semantics=("parallel",)),
    )(xin_t, w_big_t, c_col, b1_col, w2t, b2_col, w3_col, b3)
    return out[0]


# ----------------------------------------------------------------------------
# pure-JAX reference (mirrors the PyTorch forward, eval-mode BN / no dropout)
# ----------------------------------------------------------------------------
def deepfm_ref(p, user_ids, item_ids, user_feats, item_feats, train=True):
    W_item_eff = (p["A"] @ p["B"] + p["W_item"]) if train else p["W_item"]
    user_embs = p["W_user"][user_ids][:, None, :]
    item_embs = W_item_eff[item_ids][:, None, :]
    user_feat_embs = jnp.einsum("ij,ki->kij", p["W_ufeat"], user_feats)
    item_feat_embs = jnp.einsum("ij,ki->kij", p["W_ifeat"], item_feats)
    all_embs = jnp.concatenate(
        [user_embs, item_embs, user_feat_embs, item_feat_embs], axis=1)
    pow_of_sum = jnp.sum(all_embs, 1) ** 2
    sum_of_pow = jnp.sum(all_embs ** 2, 1)
    fm = 0.5 * jnp.sum(pow_of_sum - sum_of_pow, -1)
    feat_bias = jnp.concatenate(
        [user_feats * p["user_feat_bias"], item_feats * p["item_feat_bias"]], -1)
    x_biases = jnp.concatenate(
        [p["user_bias"][user_ids][:, None],
         p["item_bias"][item_ids][:, None], feat_bias], -1).sum(1)
    fm = fm + x_biases + p["offset"][0]

    x = all_embs.reshape(all_embs.shape[0], -1)
    eps = 1e-5
    h1 = x @ p["W1"] + p["b1"]
    h1 = (h1 - p["bn1_mean"]) / jnp.sqrt(p["bn1_var"] + eps) * p["bn1_gamma"] + p["bn1_beta"]
    h1 = jnp.maximum(h1, 0.0)
    h2 = h1 @ p["W2"] + p["b2"]
    h2 = (h2 - p["bn2_mean"]) / jnp.sqrt(p["bn2_var"] + eps) * p["bn2_gamma"] + p["bn2_beta"]
    h2 = jnp.maximum(h2, 0.0)
    dnn = (h2 @ p["W3"] + p["b3"])[:, 0]
    return fm + dnn


# ----------------------------------------------------------------------------
# deterministic parameter init + demo run
# ----------------------------------------------------------------------------
def make_params(key, num_users, num_items, num_user_feats, num_item_feats,
                n_factors, rank):
    ks = jax.random.split(key, 24)
    F = n_factors
    E = (2 + num_user_feats + num_item_feats) * F
    H1, H2 = 4 * F, 2 * F

    def kaiming_fan_out(k, shape):            # nn.init.kaiming_normal_(mode='fan_out')
        return jax.random.normal(k, shape, jnp.float32) * jnp.sqrt(2.0 / shape[0])

    def lin_w(k, fan_in, fan_out):            # stored (in, out)
        bound = 1.0 / jnp.sqrt(fan_in)
        return jax.random.uniform(k, (fan_in, fan_out), jnp.float32, -bound, bound)

    def lin_b(k, fan_in, fan_out):
        bound = 1.0 / jnp.sqrt(fan_in)
        return jax.random.uniform(k, (fan_out,), jnp.float32, -bound, bound)

    p = dict(
        W_user=kaiming_fan_out(ks[0], (num_users, F)),
        W_item=kaiming_fan_out(ks[1], (num_items, F)),
        W_ufeat=kaiming_fan_out(ks[2], (num_user_feats, F)),
        W_ifeat=kaiming_fan_out(ks[3], (num_item_feats, F)),
        user_bias=jax.random.normal(ks[4], (num_users,), jnp.float32) * 0.05,
        item_bias=jax.random.normal(ks[5], (num_items,), jnp.float32) * 0.05,
        user_feat_bias=jax.random.normal(ks[6], (num_user_feats,), jnp.float32) * 0.05,
        item_feat_bias=jax.random.normal(ks[7], (num_item_feats,), jnp.float32) * 0.05,
        offset=jax.random.normal(ks[8], (1,), jnp.float32) * 0.05,
        # low-rank item update (nonzero so the train path is exercised)
        A=jax.random.normal(ks[9], (num_items, rank), jnp.float32) * 0.1,
        B=jax.random.normal(ks[10], (rank, F), jnp.float32) * jnp.sqrt(1.0 / rank),
        # MLP
        W1=lin_w(ks[11], E, H1), b1=lin_b(ks[12], E, H1),
        W2=lin_w(ks[13], H1, H2), b2=lin_b(ks[14], H1, H2),
        W3=lin_w(ks[15], H2, 1), b3=lin_b(ks[16], H2, 1),
        # BatchNorm (eval-mode) params / running stats (non-trivial values)
        bn1_gamma=jax.random.uniform(ks[17], (H1,), jnp.float32, 0.5, 1.5),
        bn1_beta=jax.random.normal(ks[18], (H1,), jnp.float32) * 0.1,
        bn1_mean=jax.random.normal(ks[19], (H1,), jnp.float32) * 0.1,
        bn1_var=jax.random.uniform(ks[20], (H1,), jnp.float32, 0.5, 1.5),
        bn2_gamma=jax.random.uniform(ks[21], (H2,), jnp.float32, 0.5, 1.5),
        bn2_beta=jax.random.normal(ks[22], (H2,), jnp.float32) * 0.1,
        bn2_mean=jnp.zeros((H2,), jnp.float32),
        bn2_var=jnp.ones((H2,), jnp.float32),
    )
    return p


if __name__ == "__main__":
    num_users, num_items = 32, 32
    num_user_feats, num_item_feats = 6, 10
    n_factors, rank = 16, 4
    B = 8

    key = jax.random.PRNGKey(0)
    kp, k1, k2, k3, k4 = jax.random.split(key, 5)
    params = make_params(kp, num_users, num_items, num_user_feats,
                         num_item_feats, n_factors, rank)

    user_ids = jax.random.randint(k1, (B,), 0, num_users, dtype=jnp.int32)
    item_ids = jax.random.randint(k2, (B,), 0, num_items, dtype=jnp.int32)
    user_feats = (jax.random.uniform(k3, (B, num_user_feats)) < 0.4).astype(jnp.float32)
    item_feats = (jax.random.uniform(k4, (B, num_item_feats)) < 0.4).astype(jnp.float32)

    # train path (includes A @ B low-rank item update)
    preds_tr = deepfm_forward(params, user_ids, item_ids, user_feats,
                              item_feats, train=True)
    preds_tr = jax.block_until_ready(preds_tr)
    ref_tr = deepfm_ref(params, user_ids, item_ids, user_feats, item_feats,
                        train=True)
    assert preds_tr.shape == (B,)
    assert jnp.allclose(preds_tr, ref_tr, rtol=1e-4, atol=1e-4), (preds_tr, ref_tr)

    # eval path (raw item embedding table)
    preds_ev = deepfm_forward(params, user_ids, item_ids, user_feats,
                              item_feats, train=False)
    preds_ev = jax.block_until_ready(preds_ev)
    ref_ev = deepfm_ref(params, user_ids, item_ids, user_feats, item_feats,
                        train=False)
    assert preds_ev.shape == (B,)
    assert jnp.allclose(preds_ev, ref_ev, rtol=1e-4, atol=1e-4), (preds_ev, ref_ev)

    print("KERNEL_OK")
</pallas_src>

<mosaic_0001>
module attributes {stable_mosaic.version = 11 : i64} {
  func.func @deepfm_kernel(%arg0: i32, %arg1: memref<49x8xf32, #tpu.memory_space<vmem>>, %arg2: memref<81x49xf32, #tpu.memory_space<vmem>>, %arg3: memref<49x1xf32, #tpu.memory_space<vmem>>, %arg4: memref<64x1xf32, #tpu.memory_space<vmem>>, %arg5: memref<32x64xf32, #tpu.memory_space<vmem>>, %arg6: memref<32x1xf32, #tpu.memory_space<vmem>>, %arg7: memref<32x1xf32, #tpu.memory_space<vmem>>, %arg8: memref<1x1xf32, #tpu.memory_space<vmem>>, %arg9: memref<1x8xf32, #tpu.memory_space<vmem>>) attributes {dimension_semantics = [#tpu.dimension_semantics<parallel>], iteration_bounds = array<i64: 1>, scalar_prefetch = 0 : i64, scratch_operands = 0 : i64, tpu.core_type = #tpu.core_type<tc>, window_params = [{transform_indices = @transform_0, window_bounds = array<i64: 49, 8>}, {pipeline_mode = #tpu.pipeline_mode<synchronous>, transform_indices = @transform_1, window_bounds = array<i64: 81, 49>}, {pipeline_mode = #tpu.pipeline_mode<synchronous>, transform_indices = @transform_2, window_bounds = array<i64: 49, 1>}, {pipeline_mode = #tpu.pipeline_mode<synchronous>, transform_indices = @transform_3, window_bounds = array<i64: 64, 1>}, {pipeline_mode = #tpu.pipeline_mode<synchronous>, transform_indices = @transform_4, window_bounds = array<i64: 32, 64>}, {pipeline_mode = #tpu.pipeline_mode<synchronous>, transform_indices = @transform_5, window_bounds = array<i64: 32, 1>}, {pipeline_mode = #tpu.pipeline_mode<synchronous>, transform_indices = @transform_6, window_bounds = array<i64: 32, 1>}, {pipeline_mode = #tpu.pipeline_mode<synchronous>, transform_indices = @transform_7, window_bounds = array<i64: 1, 1>}, {transform_indices = @transform_8, window_bounds = array<i64: 1, 8>}]} {
    %c0 = arith.constant 0 : index
    %c0_0 = arith.constant 0 : index
    %0 = vector.load %arg1[%c0, %c0_0] : memref<49x8xf32, #tpu.memory_space<vmem>>, vector<49x8xf32>
    %c0_1 = arith.constant 0 : index
    %c0_2 = arith.constant 0 : index
    %1 = vector.load %arg2[%c0_1, %c0_2] : memref<81x49xf32, #tpu.memory_space<vmem>>, vector<81x49xf32>
    %cst = arith.constant dense<0.000000e+00> : vector<81x8xf32>
    %2 = tpu.matmul %1, %0, %cst {dimension_numbers = #tpu.dot_dimension_numbers<[1], [0], [0], [1], [0, 0, 1, 1], [], []>} : vector<81x49xf32>, vector<49x8xf32>, vector<81x8xf32> -> vector<81x8xf32>
    %3 = vector.extract_strided_slice %2 {offsets = [0, 0], sizes = [64, 8], strides = [1, 1]} : vector<81x8xf32> to vector<64x8xf32>
    %c0_3 = arith.constant 0 : index
    %c0_4 = arith.constant 0 : index
    %4 = vector.load %arg4[%c0_3, %c0_4] : memref<64x1xf32, #tpu.memory_space<vmem>>, vector<64x1xf32>
    %5 = vector.broadcast %4 : vector<64x1xf32> to vector<64x8xf32>
    %6 = arith.addf %3, %5 : vector<64x8xf32>
    %7 = vector.extract_strided_slice %2 {offsets = [64, 0], sizes = [16, 8], strides = [1, 1]} : vector<81x8xf32> to vector<16x8xf32>
    %8 = vector.extract_strided_slice %2 {offsets = [80, 0], sizes = [1, 8], strides = [1, 1]} : vector<81x8xf32> to vector<1x8xf32>
    %9 = arith.mulf %0, %0 : vector<49x8xf32>
    %c0_5 = arith.constant 0 : index
    %c0_6 = arith.constant 0 : index
    %10 = vector.load %arg3[%c0_5, %c0_6] : memref<49x1xf32, #tpu.memory_space<vmem>>, vector<49x1xf32>
    %11 = vector.broadcast %10 : vector<49x1xf32> to vector<49x8xf32>
    %12 = arith.mulf %9, %11 : vector<49x8xf32>
    %cst_7 = arith.constant dense<0.000000e+00> : vector<8xf32>
    %13 = vector.multi_reduction <add>, %12, %cst_7 [0] : vector<49x8xf32> to vector<8xf32>
    %14 = vector.shape_cast %13 : vector<8xf32> to vector<1x8xf32>
    %15 = arith.mulf %7, %7 : vector<16x8xf32>
    %cst_8 = arith.constant dense<0.000000e+00> : vector<8xf32>
    %16 = vector.multi_reduction <add>, %15, %cst_8 [0] : vector<16x8xf32> to vector<8xf32>
    %17 = vector.shape_cast %16 : vector<8xf32> to vector<1x8xf32>
    %18 = arith.subf %17, %14 : vector<1x8xf32>
    %cst_9 = arith.constant 5.000000e-01 : f32
    %19 = vector.broadcast %cst_9 : f32 to vector<1x8xf32>
    %20 = arith.mulf %19, %18 : vector<1x8xf32>
    %cst_10 = arith.constant 0.000000e+00 : f32
    %21 = vector.broadcast %cst_10 : f32 to vector<64x8xf32>
    %22 = arith.maximumf %6, %21 : vector<64x8xf32>
    %c0_11 = arith.constant 0 : index
    %c0_12 = arith.constant 0 : index
    %23 = vector.load %arg5[%c0_11, %c0_12] : memref<32x64xf32, #tpu.memory_space<vmem>>, vector<32x64xf32>
    %cst_13 = arith.constant dense<0.000000e+00> : vector<32x8xf32>
    %24 = tpu.matmul %23, %22, %cst_13 {dimension_numbers = #tpu.dot_dimension_numbers<[1], [0], [0], [1], [0, 0, 1, 1], [], []>} : vector<32x64xf32>, vector<64x8xf32>, vector<32x8xf32> -> vector<32x8xf32>
    %c0_14 = arith.constant 0 : index
    %c0_15 = arith.constant 0 : index
    %25 = vector.load %arg6[%c0_14, %c0_15] : memref<32x1xf32, #tpu.memory_space<vmem>>, vector<32x1xf32>
    %26 = vector.broadcast %25 : vector<32x1xf32> to vector<32x8xf32>
    %27 = arith.addf %24, %26 : vector<32x8xf32>
    %cst_16 = arith.constant 0.000000e+00 : f32
    %28 = vector.broadcast %cst_16 : f32 to vector<32x8xf32>
    %29 = arith.maximumf %27, %28 : vector<32x8xf32>
    %c0_17 = arith.constant 0 : index
    %c0_18 = arith.constant 0 : index
    %30 = vector.load %arg7[%c0_17, %c0_18] : memref<32x1xf32, #tpu.memory_space<vmem>>, vector<32x1xf32>
    %31 = vector.broadcast %30 : vector<32x1xf32> to vector<32x8xf32>
    %32 = arith.mulf %29, %31 : vector<32x8xf32>
    %cst_19 = arith.constant dense<0.000000e+00> : vector<8xf32>
    %33 = vector.multi_reduction <add>, %32, %cst_19 [0] : vector<32x8xf32> to vector<8xf32>
    %34 = vector.shape_cast %33 : vector<8xf32> to vector<1x8xf32>
    %c0_20 = arith.constant 0 : index
    %c0_21 = arith.constant 0 : index
    %35 = vector.load %arg8[%c0_20, %c0_21] : memref<1x1xf32, #tpu.memory_space<vmem>>, vector<1x1xf32>
    %36 = vector.broadcast %35 : vector<1x1xf32> to vector<1x8xf32>
    %37 = arith.addf %34, %36 : vector<1x8xf32>
    %38 = arith.addf %20, %8 : vector<1x8xf32>
    %39 = arith.addf %38, %37 : vector<1x8xf32>
    %c0_22 = arith.constant 0 : index
    %c0_23 = arith.constant 0 : index
    %40 = vector.load %arg9[%c0_22, %c0_23] : memref<1x8xf32, #tpu.memory_space<vmem>>, vector<1x8xf32>
    tpu.vector_store %arg9[%c0_22, %c0_23], %39 {strides = array<i32>} : memref<1x8xf32, #tpu.memory_space<vmem>>, vector<1x8xf32>,
    return
  }
  func.func @transform_0(%arg0: i32) -> (i32, i32) {
    %c0_i32 = arith.constant 0 : i32
    %c0_i32_0 = arith.constant 0 : i32
    return %c0_i32, %arg0 : i32, i32
  }
  func.func @transform_1(%arg0: i32) -> (i32, i32) {
    %c0_i32 = arith.constant 0 : i32
    %c0_i32_0 = arith.constant 0 : i32
    %c0_i32_1 = arith.constant 0 : i32
    return %c0_i32, %c0_i32_0 : i32, i32
  }
  func.func @transform_2(%arg0: i32) -> (i32, i32) {
    %c0_i32 = arith.constant 0 : i32
    %c0_i32_0 = arith.constant 0 : i32
    %c0_i32_1 = arith.constant 0 : i32
    return %c0_i32, %c0_i32_0 : i32, i32
  }
  func.func @transform_3(%arg0: i32) -> (i32, i32) {
    %c0_i32 = arith.constant 0 : i32
    %c0_i32_0 = arith.constant 0 : i32
    %c0_i32_1 = arith.constant 0 : i32
    return %c0_i32, %c0_i32_0 : i32, i32
  }
  func.func @transform_4(%arg0: i32) -> (i32, i32) {
    %c0_i32 = arith.constant 0 : i32
    %c0_i32_0 = arith.constant 0 : i32
    %c0_i32_1 = arith.constant 0 : i32
    return %c0_i32, %c0_i32_0 : i32, i32
  }
  func.func @transform_5(%arg0: i32) -> (i32, i32) {
    %c0_i32 = arith.constant 0 : i32
    %c0_i32_0 = arith.constant 0 : i32
    %c0_i32_1 = arith.constant 0 : i32
    return %c0_i32, %c0_i32_0 : i32, i32
  }
  func.func @transform_6(%arg0: i32) -> (i32, i32) {
    %c0_i32 = arith.constant 0 : i32
    %c0_i32_0 = arith.constant 0 : i32
    %c0_i32_1 = arith.constant 0 : i32
    return %c0_i32, %c0_i32_0 : i32, i32
  }
  func.func @transform_7(%arg0: i32) -> (i32, i32) {
    %c0_i32 = arith.constant 0 : i32
    %c0_i32_0 = arith.constant 0 : i32
    %c0_i32_1 = arith.constant 0 : i32
    return %c0_i32, %c0_i32_0 : i32, i32
  }
  func.func @transform_8(%arg0: i32) -> (i32, i32) {
    %c0_i32 = arith.constant 0 : i32
    %c0_i32_0 = arith.constant 0 : i32
    return %c0_i32, %arg0 : i32, i32
  }
}

</mosaic_0001>

<llo_original>
// kernel: tpu_custom_call.1
$region0: #{tpu_custom_call.1}
  #allocation0 [shape = 'u32[]', space=smem, size = 0x4, offset = 0x4, fixed_abs, tag = 'smem constant byte address 0x4 - core index']
  #allocation1 [shape = 'u32[144,128]{1,0:T(1,128)}', space=vmem, size = 0x12000, scoped, tag = 'internal scratch']
  #allocation2 [shape = 'f32[1,1]{1,0:T(1,128)S(1)}', space=vmem, size = 0x200, scoped, tag = 'scoped memory for tpu_custom_call.1']
  %s0 = inlined_call_operand.vmem [shape: f32[49,8], index: 0, kind: input, shape index: {}]
  %s1 = inlined_call_operand.vmem [shape: f32[81,49], index: 1, kind: input, shape index: {}]
  %s2 = inlined_call_operand.vmem [shape: f32[49,1], index: 2, kind: input, shape index: {}]
  %s3 = inlined_call_operand.vmem [shape: f32[64,1], index: 3, kind: input, shape index: {}]
  %s4 = inlined_call_operand.vmem [shape: f32[32,64], index: 4, kind: input, shape index: {}]
  %s5 = inlined_call_operand.vmem [shape: f32[32,1], index: 5, kind: input, shape index: {}]
  %s6 = inlined_call_operand.vmem [shape: f32[32,1], index: 6, kind: input, shape index: {}]
  %s7 = inlined_call_operand.<no memory space> [shape: f32[1,1], index: 7, kind: input, shape index: {}]
  %s8 = inlined_call_operand.hbm [shape: f32[1,8], index: 8, kind: output, shape index: {}]
  %s9 = sld [smem:[#allocation0]]
  $region42: #{tpu_custom_call.1} parent=0
    _
  %s11 = ssub.s32 1, %s9
  %s12 = scalar_select 0, %s11, %s9
  %v13 = vstv %s7
  %14 = vst [vmem:[#allocation2] sm:$0x1] %v13
  $region1: #{tpu_custom_call.1} parent=0
    #allocation3 [shape = 'u8[512]{0}', space=vmem, size = 0x400, scoped, tag = 'output window, operand 0, single buffered']
    #allocation4 [shape = 's32[1]{0}', space=sflag, size = 0x4, scoped, tag = 'scoped memory for tpu_custom_call.1']
    %15 = vsyncpa [#allocation4], 0
    // Predicated region
    $region2: #{tpu_custom_call.1} parent=1 // pred_check
      _
    $region3: #{tpu_custom_call.1} parent=1 // pred_check_branch
      %17 = sbr.rel (0) target = $region5
    $region4: #{tpu_custom_call.1} parent=1 // pred_region
      _
    $region5: #{tpu_custom_call.1} parent=1 // pred_fallthru
      _
    // Predicated region
    $region6: #{tpu_custom_call.1} parent=1 // pred_check
      _
    $region7: #{tpu_custom_call.1} parent=1 // pred_check_branch
      %19 = sbr.rel (0) target = $region9
    $region8: #{tpu_custom_call.1} parent=1 // pred_region
      _
    $region9: #{tpu_custom_call.1} parent=1 // pred_fallthru
      _
    // Predicated region
    $region10: #{tpu_custom_call.1} parent=1 // pred_check
      _
    $region11: #{tpu_custom_call.1} parent=1 // pred_check_branch
      %21 = sbr.rel (0) target = $region13
    $region12: #{tpu_custom_call.1} parent=1 // pred_region
      _
    $region13: #{tpu_custom_call.1} parent=1 // pred_fallthru
      _
    // Predicated region
    $region14: #{tpu_custom_call.1} parent=1 // pred_check
      _
    $region15: #{tpu_custom_call.1} parent=1 // pred_check_branch
      %23 = sbr.rel (0) target = $region17
    $region16: #{tpu_custom_call.1} parent=1 // pred_region
      _
    $region17: #{tpu_custom_call.1} parent=1 // pred_fallthru
      _
    // Predicated region
    $region18: #{tpu_custom_call.1} parent=1 // pred_check
      _
    $region19: #{tpu_custom_call.1} parent=1 // pred_check_branch
      %25 = sbr.rel (0) target = $region21
    $region20: #{tpu_custom_call.1} parent=1 // pred_region
      _
    $region21: #{tpu_custom_call.1} parent=1 // pred_fallthru
      _
    // Predicated region
    $region22: #{tpu_custom_call.1} parent=1 // pred_check
      _
    $region23: #{tpu_custom_call.1} parent=1 // pred_check_branch
      %27 = sbr.rel (0) target = $region25
    $region24: #{tpu_custom_call.1} parent=1 // pred_region
      _
    $region25: #{tpu_custom_call.1} parent=1 // pred_fallthru
      _
    // Predicated region
    $region26: #{tpu_custom_call.1} parent=1 // pred_check
      _
    $region27: #{tpu_custom_call.1} parent=1 // pred_check_branch
      %29 = sbr.rel (0) target = $region29
    $region28: #{tpu_custom_call.1} parent=1 // pred_region
      _
    $region29: #{tpu_custom_call.1} parent=1 // pred_fallthru
      _
    // Predicated region
    $region30: #{tpu_custom_call.1} parent=1 // pred_check
      _
    $region31: #{tpu_custom_call.1} parent=1 // pred_check_branch
      %31 = sbr.rel (0) target = $region33
    $region32: #{tpu_custom_call.1} parent=1 // pred_region
      _
    $region33: #{tpu_custom_call.1} parent=1 // pred_fallthru
      _
    %v32 = vld [vmem:[%s0] sm:$0xff]
    %v33 = vld [vmem:[%s0 + $0x8] sm:$0xff]
    %v34 = vld [vmem:[%s0 + $0x10] sm:$0xff]
    %v35 = vld [vmem:[%s0 + $0x18] sm:$0xff]
    %v36 = vld [vmem:[%s0 + $0x20] sm:$0xff]
    %v37 = vld [vmem:[%s0 + $0x28] sm:$0xff]
    %v38 = vld [vmem:[%s0 + $0x30] sm:$0x1]
    %v39 = vld [vmem:[%s1] sm:$0xff]
    %v40 = vld [vmem:[%s1 + $0x8] sm:$0xff]
    %v41 = vld [vmem:[%s1 + $0x10] sm:$0xff]
    %v42 = vld [vmem:[%s1 + $0x18] sm:$0xff]
    %v43 = vld [vmem:[%s1 + $0x20] sm:$0xff]
    %v44 = vld [vmem:[%s1 + $0x28] sm:$0xff]
    %v45 = vld [vmem:[%s1 + $0x30] sm:$0xff]
    %v46 = vld [vmem:[%s1 + $0x38] sm:$0xff]
    %v47 = vld [vmem:[%s1 + $0x40] sm:$0xff]
    %v48 = vld [vmem:[%s1 + $0x48] sm:$0xff]
    %v49 = vld [vmem:[%s1 + $0x50] sm:$0x1]
    %vm50 = vcmask 400384
    %v52 = vsel %vm50, %v39, 0
    %v55 = vsel %vm50, %v40, 0
    %v58 = vsel %vm50, %v41, 0
    %v61 = vsel %vm50, %v42, 0
    %v64 = vsel %vm50, %v43, 0
    %v67 = vsel %vm50, %v44, 0
    %v70 = vsel %vm50, %v45, 0
    %v73 = vsel %vm50, %v46, 0
    %v76 = vsel %vm50, %v47, 0
    %v79 = vsel %vm50, %v48, 0
    %v82 = vsel %vm50, %v49, 0
    %vm84 = vcmask 1040384
    %v86 = vsel %vm84, %v38, 0
    %88 = vmatprep.subr.mxu0 0.0
    %89 = vmatpush1.msra.mxu0 %v32
    %90 = vmatprep.subr.mxu0 0.0
    %91 = vmatpush1.msra.mxu0 %v33
    %92 = vmatprep.subr.mxu0 0.0
    %93 = vmatpush1.msra.mxu0 %v34
    %94 = vmatprep.subr.mxu0 0.0
    %95 = vmatpush1.msra.mxu0 %v35
    %96 = vmatprep.subr.mxu0 0.0
    %97 = vmatpush1.msra.mxu0 %v36
    %98 = vmatprep.subr.mxu0 0.0
    %99 = vmatpush1.msra.mxu0 %v37
    %100 = vmatprep.subr.mxu0 0.0
    %101 = vmatpush1.msra.mxu0 %v86
    %102 = vmatprep.subr.mxu0 0.0
    %103 = vmatpush1.msra.mxu0 0.0
    %104 = vmatprep.subr.mxu0 0.0
    %105 = vmatpush1.msra.mxu0 0.0
    %106 = vmatprep.subr.mxu0 0.0
    %107 = vmatpush1.msra.mxu0 0.0
    %108 = vmatprep.subr.mxu0 0.0
    %109 = vmatpush1.msra.mxu0 0.0
    %110 = vmatprep.subr.mxu0 0.0
    %111 = vmatpush1.msra.mxu0 0.0
    %112 = vmatprep.subr.mxu0 0.0
    %113 = vmatpush1.msra.mxu0 0.0
    %114 = vmatprep.subr.mxu0 0.0
    %115 = vmatpush1.msra.mxu0 0.0
    %116 = vmatprep.subr.mxu0 0.0
    %117 = vmatpush1.msra.mxu0 0.0
    %118 = vmatprep.subr.mxu0 0.0
    %119 = vmatpush1.msra.mxu0 0.0
    %120 = vmatprep.subr.mxu0 0.0
    %121 = vmatpush1.msra.mxu0 0.0
    %122 = vmatprep.subr.mxu0 0.0
    %123 = vmatpush1.msra.mxu0 0.0
    %124 = vmatprep.subr.mxu0 0.0
    %125 = vmatpush1.msra.mxu0 0.0
    %126 = vmatprep.subr.mxu0 0.0
    %127 = vmatpush1.msra.mxu0 0.0
    %128 = vmatprep.subr.mxu0 0.0
    %129 = vmatpush1.msra.mxu0 0.0
    %130 = vmatprep.subr.mxu0 0.0
    %131 = vmatpush1.msra.mxu0 0.0
    %132 = vmatprep.subr.mxu0 0.0
    %133 = vmatpush1.msra.mxu0 0.0
    %134 = vmatprep.subr.mxu0 0.0
    %135 = vmatpush1.msra.mxu0 0.0
    %136 = vmatprep.subr.mxu0 0.0
    %137 = vmatpush1.msra.mxu0 0.0
    %138 = vmatprep.subr.mxu0 0.0
    %139 = vmatpush1.msra.mxu0 0.0
    %140 = vmatprep.subr.mxu0 0.0
    %141 = vmatpush1.msra.mxu0 0.0
    %142 = vmatprep.subr.mxu0 0.0
    %143 = vmatpush1.msra.mxu0 0.0
    %144 = vmatprep.subr.mxu0 0.0
    %145 = vmatpush1.msra.mxu0 0.0
    %146 = vmatprep.subr.mxu0 0.0
    %147 = vmatpush1.msra.mxu0 0.0
    %148 = vmatprep.subr.mxu0 0.0
    %149 = vmatpush1.msra.mxu0 0.0
    %150 = vmatprep.subr.mxu0 0.0
    %151 = vmatpush1.msra.mxu0 0.0
    %152 = vmatprep.mubr.f32.mxu0 0.0
    %153 = vmatmul.mubr.f32.gmra.mrb[0].mxu0 %v52
    %v154 = vpop.f32.mrb[0].mxu0
    %v155 = vadd.f32 0.0, %v154
    %v156 = vpop.f32.mrb[0].mxu0
    %157 = vmatprep.mubr.f32.mxu0 0.0
    %158 = vmatmul.mubr.f32.gmra.mrb[0].mxu0 %v55
    %v159 = vpop.f32.mrb[0].mxu0
    %v160 = vadd.f32 0.0, %v159
    %v161 = vpop.f32.mrb[0].mxu0
    %162 = vmatprep.mubr.f32.mxu0 0.0
    %163 = vmatmul.mubr.f32.gmra.mrb[0].mxu0 %v58
    %v164 = vpop.f32.mrb[0].mxu0
    %v165 = vadd.f32 0.0, %v164
    %v166 = vpop.f32.mrb[0].mxu0
    %167 = vmatprep.mubr.f32.mxu0 0.0
    %168 = vmatmul.mubr.f32.gmra.mrb[0].mxu0 %v61
    %v169 = vpop.f32.mrb[0].mxu0
    %v170 = vadd.f32 0.0, %v169
    %v171 = vpop.f32.mrb[0].mxu0
    %172 = vmatprep.mubr.f32.mxu0 0.0
    %173 = vmatmul.mubr.f32.gmra.mrb[0].mxu0 %v64
    %v174 = vpop.f32.mrb[0].mxu0
    %v175 = vadd.f32 0.0, %v174
    %v176 = vpop.f32.mrb[0].mxu0
    %177 = vmatprep.mubr.f32.mxu0 0.0
    %178 = vmatmul.mubr.f32.gmra.mrb[0].mxu0 %v67
    %v179 = vpop.f32.mrb[0].mxu0
    %v180 = vadd.f32 0.0, %v179
    %v181 = vpop.f32.mrb[0].mxu0
    %182 = vmatprep.mubr.f32.mxu0 0.0
    %183 = vmatmul.mubr.f32.gmra.mrb[0].mxu0 %v70
    %v184 = vpop.f32.mrb[0].mxu0
    %v185 = vadd.f32 0.0, %v184
    %v186 = vpop.f32.mrb[0].mxu0
    %187 = vmatprep.mubr.f32.mxu0 0.0
    %188 = vmatmul.mubr.f32.gmra.mrb[0].mxu0 %v73
    %v189 = vpop.f32.mrb[0].mxu0
    %v190 = vadd.f32 0.0, %v189
    %v191 = vpop.f32.mrb[0].mxu0
    %192 = vmatprep.mubr.f32.mxu0 0.0
    %193 = vmatmul.mubr.f32.gmra.mrb[0].mxu0 %v76
    %v194 = vpop.f32.mrb[0].mxu0
    %v195 = vadd.f32 0.0, %v194
    %v196 = vpop.f32.mrb[0].mxu0
    %197 = vmatprep.mubr.f32.mxu0 0.0
    %198 = vmatmul.mubr.f32.gmra.mrb[0].mxu0 %v79
    %v199 = vpop.f32.mrb[0].mxu0
    %v200 = vadd.f32 0.0, %v199
    %v201 = vpop.f32.mrb[0].mxu0
    %202 = vmatprep.mubr.f32.mxu0 0.0
    %203 = vmatmul.mubr.f32.gmra.mrb[0].mxu0 %v82
    %v204 = vpop.f32.mrb[0].mxu0
    %v205 = vadd.f32 0.0, %v204
    %v206 = vpop.f32.mrb[0].mxu0
    %207 = vdwg.mxu0
    %v208 = vld [vmem:[%s3] sm:$0xff]
    %v209 = vld [vmem:[%s3 + $0x8] sm:$0xff]
    %v210 = vld [vmem:[%s3 + $0x10] sm:$0xff]
    %v211 = vld [vmem:[%s3 + $0x18] sm:$0xff]
    %v212 = vld [vmem:[%s3 + $0x20] sm:$0xff]
    %v213 = vld [vmem:[%s3 + $0x28] sm:$0xff]
    %v214 = vld [vmem:[%s3 + $0x30] sm:$0xff]
    %v215 = vld [vmem:[%s3 + $0x38] sm:$0xff]
    %217 = vset.pattern.permute.xlu0 0
    %218 = vperm.xlu0 %217, %v208
    %v219 = vpop.permute.xlu0 %218
    %222 = vset.pattern.permute.xlu0 0
    %223 = vperm.xlu0 %222, %v209
    %v224 = vpop.permute.xlu0 %223
    %227 = vset.pattern.permute.xlu0 0
    %228 = vperm.xlu0 %227, %v210
    %v229 = vpop.permute.xlu0 %228
    %232 = vset.pattern.permute.xlu0 0
    %233 = vperm.xlu0 %232, %v211
    %v234 = vpop.permute.xlu0 %233
    %237 = vset.pattern.permute.xlu0 0
    %238 = vperm.xlu0 %237, %v212
    %v239 = vpop.permute.xlu0 %238
    %242 = vset.pattern.permute.xlu0 0
    %243 = vperm.xlu0 %242, %v213
    %v244 = vpop.permute.xlu0 %243
    %247 = vset.pattern.permute.xlu0 0
    %248 = vperm.xlu0 %247, %v214
    %v249 = vpop.permute.xlu0 %248
    %252 = vset.pattern.permute.xlu0 0
    %253 = vperm.xlu0 %252, %v215
    %v254 = vpop.permute.xlu0 %253
    %v256 = vadd.f32 %v155, %v219
    %v257 = vadd.f32 %v160, %v224
    %v258 = vadd.f32 %v165, %v229
    %v259 = vadd.f32 %v170, %v234
    %v260 = vadd.f32 %v175, %v239
    %v261 = vadd.f32 %v180, %v244
    %v262 = vadd.f32 %v185, %v249
    %v263 = vadd.f32 %v190, %v254
    %v264 = vmul.f32 %v32, %v32
    %v265 = vmul.f32 %v33, %v33
    %v266 = vmul.f32 %v34, %v34
    %v267 = vmul.f32 %v35, %v35
    %v268 = vmul.f32 %v36, %v36
    %v269 = vmul.f32 %v37, %v37
    %v270 = vmul.f32 %v38, %v38
    %v271 = vld [vmem:[%s2] sm:$0xff]
    %v272 = vld [vmem:[%s2 + $0x8] sm:$0xff]
    %v273 = vld [vmem:[%s2 + $0x10] sm:$0xff]
    %v274 = vld [vmem:[%s2 + $0x18] sm:$0xff]
    %v275 = vld [vmem:[%s2 + $0x20] sm:$0xff]
    %v276 = vld [vmem:[%s2 + $0x28] sm:$0xff]
    %v277 = vld [vmem:[%s2 + $0x30] sm:$0x1]
    %279 = vset.pattern.permute.xlu0 0
    %280 = vperm.xlu0 %279, %v271
    %v281 = vpop.permute.xlu0 %280
    %284 = vset.pattern.permute.xlu0 0
    %285 = vperm.xlu0 %284, %v272
    %v286 = vpop.permute.xlu0 %285
    %289 = vset.pattern.permute.xlu0 0
    %290 = vperm.xlu0 %289, %v273
    %v291 = vpop.permute.xlu0 %290
    %294 = vset.pattern.permute.xlu0 0
    %295 = vperm.xlu0 %294, %v274
    %v296 = vpop.permute.xlu0 %295
    %299 = vset.pattern.permute.xlu0 0
    %300 = vperm.xlu0 %299, %v275
    %v301 = vpop.permute.xlu0 %300
    %304 = vset.pattern.permute.xlu0 0
    %305 = vperm.xlu0 %304, %v276
    %v306 = vpop.permute.xlu0 %305
    %309 = vset.pattern.permute.xlu0 0
    %310 = vperm.xlu0 %309, %v277
    %v311 = vpop.permute.xlu0 %310
    %v313 = vmul.f32 %v264, %v281
    %v314 = vmul.f32 %v265, %v286
    %v315 = vmul.f32 %v266, %v291
    %v316 = vmul.f32 %v267, %v296
    %v317 = vmul.f32 %v268, %v301
    %v318 = vmul.f32 %v269, %v306
    %v319 = vmul.f32 %v270, %v311
    %vm320 = vcmask 64512
    %v321 = vsel %vm320, %v313, 0.0
    %v322 = vsel %vm320, %v314, 0.0
    %v323 = vadd.f32 %v321, %v322
    %v324 = vsel %vm320, %v315, 0.0
    %v325 = vadd.f32 %v323, %v324
    %v326 = vsel %vm320, %v316, 0.0
    %v327 = vadd.f32 %v325, %v326
    %v328 = vsel %vm320, %v317, 0.0
    %v329 = vadd.f32 %v327, %v328
    %v330 = vsel %vm320, %v318, 0.0
    %v331 = vadd.f32 %v329, %v330
    %vm332 = vcmask 57344
    %v333 = vsel %vm332, %v319, 0.0
    %v334 = vadd.f32 %v331, %v333
    %v335 = vrot.slane %v334, 4
    %v336 = vadd.f32 %v334, %v335
    %v337 = vrot.slane %v336, 2
    %v338 = vadd.f32 %v336, %v337
    %v339 = vrot.slane %v338, 1
    %v340 = vadd.f32 %v338, %v339
    %v341 = vmul.f32 %v195, %v195
    %v342 = vmul.f32 %v200, %v200
    %v343 = vsel %vm320, %v341, 0.0
    %v344 = vsel %vm320, %v342, 0.0
    %v345 = vadd.f32 %v343, %v344
    %v346 = vrot.slane %v345, 4
    %v347 = vadd.f32 %v345, %v346
    %v348 = vrot.slane %v347, 2
    %v349 = vadd.f32 %v347, %v348
    %v350 = vrot.slane %v349, 1
    %v351 = vadd.f32 %v349, %v350
    %v352 = vsub.f32 %v351, %v340
    %v353 = vmul.f32 %v352, 0.5
    %v354 = vmax.f32 %v256, 0.0
    %v355 = vmax.f32 %v257, 0.0
    %v356 = vmax.f32 %v258, 0.0
    %v357 = vmax.f32 %v259, 0.0
    %v358 = vmax.f32 %v260, 0.0
    %v359 = vmax.f32 %v261, 0.0
    %v360 = vmax.f32 %v262, 0.0
    %v361 = vmax.f32 %v263, 0.0
    %v362 = vld [vmem:[%s4] sm:$0xff]
    %v363 = vld [vmem:[%s4 + $0x8] sm:$0xff]
    %v364 = vld [vmem:[%s4 + $0x10] sm:$0xff]
    %v365 = vld [vmem:[%s4 + $0x18] sm:$0xff]
    %v366 = vld [vmem:[%s5] sm:$0xff]
    %v367 = vld [vmem:[%s5 + $0x8] sm:$0xff]
    %v368 = vld [vmem:[%s5 + $0x10] sm:$0xff]
    %v369 = vld [vmem:[%s5 + $0x18] sm:$0xff]
    %371 = vset.pattern.permute.xlu0 0
    %372 = vperm.xlu0 %371, %v366
    %v373 = vpop.permute.xlu0 %372
    %376 = vset.pattern.permute.xlu0 0
    %377 = vperm.xlu0 %376, %v367
    %v378 = vpop.permute.xlu0 %377
    %381 = vset.pattern.permute.xlu0 0
    %382 = vperm.xlu0 %381, %v368
    %v383 = vpop.permute.xlu0 %382
    %386 = vset.pattern.permute.xlu0 0
    %387 = vperm.xlu0 %386, %v369
    %v388 = vpop.permute.xlu0 %387
    %vm390 = vcmask 523264
    %v392 = vsel %vm390, %v362, 0
    %v395 = vsel %vm390, %v363, 0
    %v398 = vsel %vm390, %v364, 0
    %v401 = vsel %vm390, %v365, 0
    %403 = vmatprep.subr.mxu0 0.0
    %404 = vmatpush1.msra.mxu0 %v354
    %405 = vmatprep.subr.mxu0 0.0
    %406 = vmatpush1.msra.mxu0 %v355
    %407 = vmatprep.subr.mxu0 0.0
    %408 = vmatpush1.msra.mxu0 %v356
    %409 = vmatprep.subr.mxu0 0.0
    %410 = vmatpush1.msra.mxu0 %v357
    %411 = vmatprep.subr.mxu0 0.0
    %412 = vmatpush1.msra.mxu0 %v358
    %413 = vmatprep.subr.mxu0 0.0
    %414 = vmatpush1.msra.mxu0 %v359
    %415 = vmatprep.subr.mxu0 0.0
    %416 = vmatpush1.msra.mxu0 %v360
    %417 = vmatprep.subr.mxu0 0.0
    %418 = vmatpush1.msra.mxu0 %v361
    %419 = vmatprep.subr.mxu0 0.0
    %420 = vmatpush1.msra.mxu0 0.0
    %421 = vmatprep.subr.mxu0 0.0
    %422 = vmatpush1.msra.mxu0 0.0
    %423 = vmatprep.subr.mxu0 0.0
    %424 = vmatpush1.msra.mxu0 0.0
    %425 = vmatprep.subr.mxu0 0.0
    %426 = vmatpush1.msra.mxu0 0.0
    %427 = vmatprep.subr.mxu0 0.0
    %428 = vmatpush1.msra.mxu0 0.0
    %429 = vmatprep.subr.mxu0 0.0
    %430 = vmatpush1.msra.mxu0 0.0
    %431 = vmatprep.subr.mxu0 0.0
    %432 = vmatpush1.msra.mxu0 0.0
    %433 = vmatprep.subr.mxu0 0.0
    %434 = vmatpush1.msra.mxu0 0.0
    %435 = vmatprep.subr.mxu0 0.0
    %436 = vmatpush1.msra.mxu0 0.0
    %437 = vmatprep.subr.mxu0 0.0
    %438 = vmatpush1.msra.mxu0 0.0
    %439 = vmatprep.subr.mxu0 0.0
    %440 = vmatpush1.msra.mxu0 0.0
    %441 = vmatprep.subr.mxu0 0.0
    %442 = vmatpush1.msra.mxu0 0.0
    %443 = vmatprep.subr.mxu0 0.0
    %444 = vmatpush1.msra.mxu0 0.0
    %445 = vmatprep.subr.mxu0 0.0
    %446 = vmatpush1.msra.mxu0 0.0
    %447 = vmatprep.subr.mxu0 0.0
    %448 = vmatpush1.msra.mxu0 0.0
    %449 = vmatprep.subr.mxu0 0.0
    %450 = vmatpush1.msra.mxu0 0.0
    %451 = vmatprep.subr.mxu0 0.0
    %452 = vmatpush1.msra.mxu0 0.0
    %453 = vmatprep.subr.mxu0 0.0
    %454 = vmatpush1.msra.mxu0 0.0
    %455 = vmatprep.subr.mxu0 0.0
    %456 = vmatpush1.msra.mxu0 0.0
    %457 = vmatprep.subr.mxu0 0.0
    %458 = vmatpush1.msra.mxu0 0.0
    %459 = vmatprep.subr.mxu0 0.0
    %460 = vmatpush1.msra.mxu0 0.0
    %461 = vmatprep.subr.mxu0 0.0
    %462 = vmatpush1.msra.mxu0 0.0
    %463 = vmatprep.subr.mxu0 0.0
    %464 = vmatpush1.msra.mxu0 0.0
    %465 = vmatprep.subr.mxu0 0.0
    %466 = vmatpush1.msra.mxu0 0.0
    %467 = vmatprep.mubr.f32.mxu0 0.0
    %468 = vmatmul.mubr.f32.gmra.mrb[0].mxu0 %v392
    %v469 = vpop.f32.mrb[0].mxu0
    %v470 = vadd.f32 %v373, %v469
    %v471 = vpop.f32.mrb[0].mxu0
    %472 = vmatprep.mubr.f32.mxu0 0.0
    %473 = vmatmul.mubr.f32.gmra.mrb[0].mxu0 %v395
    %v474 = vpop.f32.mrb[0].mxu0
    %v475 = vadd.f32 %v378, %v474
    %v476 = vpop.f32.mrb[0].mxu0
    %477 = vmatprep.mubr.f32.mxu0 0.0
    %478 = vmatmul.mubr.f32.gmra.mrb[0].mxu0 %v398
    %v479 = vpop.f32.mrb[0].mxu0
    %v480 = vadd.f32 %v383, %v479
    %v481 = vpop.f32.mrb[0].mxu0
    %482 = vmatprep.mubr.f32.mxu0 0.0
    %483 = vmatmul.mubr.f32.gmra.mrb[0].mxu0 %v401
    %v484 = vpop.f32.mrb[0].mxu0
    %v485 = vadd.f32 %v388, %v484
    %v486 = vpop.f32.mrb[0].mxu0
    %487 = vdwg.mxu0
    %v488 = vmax.f32 %v470, 0.0
    %v489 = vmax.f32 %v475, 0.0
    %v490 = vmax.f32 %v480, 0.0
    %v491 = vmax.f32 %v485, 0.0
    %v492 = vld [vmem:[%s6] sm:$0xff]
    %v493 = vld [vmem:[%s6 + $0x8] sm:$0xff]
    %v494 = vld [vmem:[%s6 + $0x10] sm:$0xff]
    %v495 = vld [vmem:[%s6 + $0x18] sm:$0xff]
    %497 = vset.pattern.permute.xlu0 0
    %498 = vperm.xlu0 %497, %v492
    %v499 = vpop.permute.xlu0 %498
    %502 = vset.pattern.permute.xlu0 0
    %503 = vperm.xlu0 %502, %v493
    %v504 = vpop.permute.xlu0 %503
    %507 = vset.pattern.permute.xlu0 0
    %508 = vperm.xlu0 %507, %v494
    %v509 = vpop.permute.xlu0 %508
    %512 = vset.pattern.permute.xlu0 0
    %513 = vperm.xlu0 %512, %v495
    %v514 = vpop.permute.xlu0 %513
    %v516 = vmul.f32 %v488, %v499
    %v517 = vmul.f32 %v489, %v504
    %v518 = vmul.f32 %v490, %v509
    %v519 = vmul.f32 %v491, %v514
    %v520 = vsel %vm320, %v516, 0.0
    %v521 = vsel %vm320, %v517, 0.0
    %v522 = vadd.f32 %v520, %v521
    %v523 = vsel %vm320, %v518, 0.0
    %v524 = vadd.f32 %v522, %v523
    %v525 = vsel %vm320, %v519, 0.0
    %v526 = vadd.f32 %v524, %v525
    %v527 = vrot.slane %v526, 4
    %v528 = vadd.f32 %v526, %v527
    %v529 = vrot.slane %v528, 2
    %v530 = vadd.f32 %v528, %v529
    %v531 = vrot.slane %v530, 1
    %v532 = vadd.f32 %v530, %v531
    %v533 = vld [vmem:[#allocation2] sm:$0x1]
    %535 = vset.pattern.permute.xlu0 0
    %536 = vperm.xlu0 %535, %v533
    %v537 = vpop.permute.xlu0 %536
    %v539 = vlaneseq
    %v540 = vshrl.u32 %v539, 7
    %v541 = vsub.s32 0, %v540
    %v542 = vrot.slane %v537, %v541
    %v543 = vadd.f32 %v532, %v542
    %v544 = vadd.f32 %v353, %v205
    %v545 = vadd.f32 %v544, %v543
    %546 = vst.msk [vmem:[#allocation3] sm:$0x1] %vm332, %v545
    // Predicated region
    $region34: #{tpu_custom_call.1} parent=1 // pred_check
      _
    $region35: #{tpu_custom_call.1} parent=1 // pred_check_branch
      %548 = sbr.rel (0) target = $region37
    $region36: #{tpu_custom_call.1} parent=1 // pred_region
      %s550 = ssub.s32 16, 16
      %551 = vsyncadd [#allocation4], %s550
      %s553 = sshll.u32 [#allocation3], 4
      %s554 = int_to_ptr.vmem [resolvable:$true] %s553
      %556 = dma.vmem_to_hbm [thread:$0]  %s554, 16, %s8, [#allocation4]
    $region37: #{tpu_custom_call.1} parent=1 // pred_fallthru
      _
    // Predicated region
    $region38: #{tpu_custom_call.1} parent=1 // pred_check
      _
    $region39: #{tpu_custom_call.1} parent=1 // pred_check_branch
      %558 = sbr.rel (0) target = $region41
    $region40: #{tpu_custom_call.1} parent=1 // pred_region
      %559 = dma.done [#allocation4], 16
    $region41: #{tpu_custom_call.1} parent=1 // pred_fallthru
      _
    %560 = vsyncpa [#allocation4], 1

</llo_original>
